<compile_context>
chip_gen: v7x
topology: tpu7x:2x2x1
jax: 0.10.0
libtpu: 0.0.40
codegen_flags: <defaults>
</compile_context>

<pallas_src>
import jax
import jax.numpy as jnp
from jax import lax
from jax.experimental import pallas as pl
from jax.experimental.pallas import tpu as pltpu

EPS = 1e-5


def _ln_withbias_kernel(x_ref, w_ref, b_ref, o_ref):
    # x_ref: (1, C, T) tile  -- C on sublanes, T spatial positions on lanes
    # w_ref, b_ref: (1, C, 1) -- broadcast along lanes
    x = x_ref[...].astype(jnp.float32)
    w = w_ref[...].astype(jnp.float32)
    b = b_ref[...].astype(jnp.float32)

    # One-pass statistics over the channel (sublane) axis.
    mu = jnp.mean(x, axis=1, keepdims=True)            # (1, 1, T)
    ex2 = jnp.mean(x * x, axis=1, keepdims=True)       # (1, 1, T)
    var = ex2 - mu * mu                                 # biased (ddof=0)
    inv = lax.rsqrt(var + EPS)                          # (1, 1, T)

    o_ref[...] = ((x - mu) * inv * w + b).astype(o_ref.dtype)


def _choose_tile_hw(hw, c, cap_bytes=2 * 1024 * 1024):
    """Lane tile: multiple of 128, big enough to amortize grid overhead,
    small enough that one f32 (C, tile) block stays under `cap_bytes`."""
    max_lanes = max(128, (cap_bytes // (4 * c)) // 128 * 128)
    full_cover = pl.cdiv(hw, 128) * 128                 # lane-padded full extent
    return min(full_cover, max_lanes, 2048)


def withbias_layernorm_nchw(x, weight, bias, *, tile_hw=None):
    """x: (B, C, H, W); weight, bias: (C,). Normalizes over channels."""
    B, C, H, W = x.shape
    HW = H * W
    if tile_hw is None:
        tile_hw = _choose_tile_hw(HW, C)
    assert tile_hw % 128 == 0

    x3 = x.reshape(B, C, HW)                            # free (contiguous merge)
    hw_pad = pl.cdiv(HW, tile_hw) * tile_hw
    if hw_pad != HW:
        # Lane padding is safe: every spatial position normalizes independently
        # over C; padded lanes are sliced off below.
        x3 = jnp.pad(x3, ((0, 0), (0, 0), (0, hw_pad - HW)))

    w3 = weight.reshape(1, C, 1)
    b3 = bias.reshape(1, C, 1)
    n_tiles = hw_pad // tile_hw

    y3 = pl.pallas_call(
        _ln_withbias_kernel,
        out_shape=jax.ShapeDtypeStruct((B, C, hw_pad), x.dtype),
        grid_spec=pltpu.PrefetchScalarGridSpec(
            num_scalar_prefetch=0,
            grid=(B, n_tiles),
            in_specs=[
                pl.BlockSpec((1, C, tile_hw), lambda bi, j: (bi, 0, j)),
                pl.BlockSpec((1, C, 1), lambda bi, j: (0, 0, 0)),
                pl.BlockSpec((1, C, 1), lambda bi, j: (0, 0, 0)),
            ],
            out_specs=pl.BlockSpec((1, C, tile_hw), lambda bi, j: (bi, 0, j)),
        ),
        compiler_params=pltpu.CompilerParams(
            # Both axes independent -> megacore sharding on v7x, neutral elsewhere.
            # VMEM budget: 2 blocks (in+out) x 2 (double-buffer) x <=2 MiB = <=8 MiB,
            # well inside default scoped VMEM on v5e (16 MiB) / v6e / v7x (32 MiB).
            dimension_semantics=("parallel", "parallel"),
        ),
    )(x3, w3, b3)

    if hw_pad != HW:
        y3 = y3[:, :, :HW]
    return y3.reshape(B, C, H, W)


def _reference(x, weight, bias):
    # plain-JAX reference matching the PyTorch forward exactly (normalize over C)
    xt = jnp.transpose(x, (0, 2, 3, 1)).astype(jnp.float32)   # (B, H, W, C)
    mu = jnp.mean(xt, axis=-1, keepdims=True)
    var = jnp.var(xt, axis=-1, keepdims=True)                  # biased (ddof=0)
    y = (xt - mu) / jnp.sqrt(var + EPS) * weight.astype(jnp.float32) \
        + bias.astype(jnp.float32)
    return jnp.transpose(y, (0, 3, 1, 2)).astype(x.dtype)


if __name__ == "__main__":
    key = jax.random.PRNGKey(0)
    kx, kw, kb = jax.random.split(key, 3)

    B, C, H, W = 2, 32, 16, 16          # normalized_shape = C = 32
    x = jax.random.normal(kx, (B, C, H, W), dtype=jnp.float32)

    # Module initializes weight=ones, bias=zeros; randomize here (deterministic
    # from PRNGKey(0)) to actually exercise the scale/shift broadcast paths.
    weight = jax.random.normal(kw, (C,), dtype=jnp.float32)
    bias = jax.random.normal(kb, (C,), dtype=jnp.float32)

    out = withbias_layernorm_nchw(x, weight, bias)
    out = jax.block_until_ready(out)

    ref = _reference(x, weight, bias)
    assert out.shape == (B, C, H, W)
    max_err = float(jnp.max(jnp.abs(out - ref)))
    assert jnp.allclose(out, ref, atol=1e-5, rtol=1e-5), max_err
    print("KERNEL_OK")
</pallas_src>

<mosaic_0001>
module attributes {stable_mosaic.version = 11 : i64} {
  func.func @_ln_withbias_kernel(%arg0: i32, %arg1: i32, %arg2: memref<1x32x256xf32, #tpu.memory_space<vmem>>, %arg3: memref<1x32x1xf32, #tpu.memory_space<vmem>>, %arg4: memref<1x32x1xf32, #tpu.memory_space<vmem>>, %arg5: memref<1x32x256xf32, #tpu.memory_space<vmem>>) attributes {dimension_semantics = [#tpu.dimension_semantics<parallel>, #tpu.dimension_semantics<parallel>], iteration_bounds = array<i64: 2, 1>, scalar_prefetch = 0 : i64, scratch_operands = 0 : i64, tpu.core_type = #tpu.core_type<tc>, window_params = [{transform_indices = @transform_0, window_bounds = array<i64: 1, 32, 256>}, {pipeline_mode = #tpu.pipeline_mode<synchronous>, transform_indices = @transform_1, window_bounds = array<i64: 1, 32, 1>}, {pipeline_mode = #tpu.pipeline_mode<synchronous>, transform_indices = @transform_2, window_bounds = array<i64: 1, 32, 1>}, {transform_indices = @transform_3, window_bounds = array<i64: 1, 32, 256>}]} {
    %c0 = arith.constant 0 : index
    %c0_0 = arith.constant 0 : index
    %c0_1 = arith.constant 0 : index
    %0 = vector.load %arg2[%c0, %c0_0, %c0_1] : memref<1x32x256xf32, #tpu.memory_space<vmem>>, vector<1x32x256xf32>
    %c0_2 = arith.constant 0 : index
    %c0_3 = arith.constant 0 : index
    %c0_4 = arith.constant 0 : index
    %1 = vector.load %arg3[%c0_2, %c0_3, %c0_4] : memref<1x32x1xf32, #tpu.memory_space<vmem>>, vector<1x32x1xf32>
    %c0_5 = arith.constant 0 : index
    %c0_6 = arith.constant 0 : index
    %c0_7 = arith.constant 0 : index
    %2 = vector.load %arg4[%c0_5, %c0_6, %c0_7] : memref<1x32x1xf32, #tpu.memory_space<vmem>>, vector<1x32x1xf32>
    %cst = arith.constant dense<0.000000e+00> : vector<1x256xf32>
    %3 = vector.multi_reduction <add>, %0, %cst [1] : vector<1x32x256xf32> to vector<1x256xf32>
    %4 = vector.shape_cast %3 : vector<1x256xf32> to vector<1x1x256xf32>
    %cst_8 = arith.constant 3.200000e+01 : f32
    %5 = vector.broadcast %cst_8 : f32 to vector<1x1x256xf32>
    %6 = arith.divf %4, %5 : vector<1x1x256xf32>
    %7 = arith.mulf %0, %0 : vector<1x32x256xf32>
    %cst_9 = arith.constant dense<0.000000e+00> : vector<1x256xf32>
    %8 = vector.multi_reduction <add>, %7, %cst_9 [1] : vector<1x32x256xf32> to vector<1x256xf32>
    %9 = vector.shape_cast %8 : vector<1x256xf32> to vector<1x1x256xf32>
    %cst_10 = arith.constant 3.200000e+01 : f32
    %10 = vector.broadcast %cst_10 : f32 to vector<1x1x256xf32>
    %11 = arith.divf %9, %10 : vector<1x1x256xf32>
    %12 = arith.mulf %6, %6 : vector<1x1x256xf32>
    %13 = arith.subf %11, %12 : vector<1x1x256xf32>
    %cst_11 = arith.constant 9.99999974E-6 : f32
    %14 = vector.broadcast %cst_11 : f32 to vector<1x1x256xf32>
    %15 = arith.addf %13, %14 : vector<1x1x256xf32>
    %16 = math.rsqrt %15 : vector<1x1x256xf32>
    %17 = vector.broadcast %6 : vector<1x1x256xf32> to vector<1x32x256xf32>
    %18 = arith.subf %0, %17 : vector<1x32x256xf32>
    %19 = vector.broadcast %16 : vector<1x1x256xf32> to vector<1x32x256xf32>
    %20 = arith.mulf %18, %19 : vector<1x32x256xf32>
    %21 = vector.broadcast %1 : vector<1x32x1xf32> to vector<1x32x256xf32>
    %22 = arith.mulf %20, %21 : vector<1x32x256xf32>
    %23 = vector.broadcast %2 : vector<1x32x1xf32> to vector<1x32x256xf32>
    %24 = arith.addf %22, %23 : vector<1x32x256xf32>
    %c0_12 = arith.constant 0 : index
    %c0_13 = arith.constant 0 : index
    %c0_14 = arith.constant 0 : index
    %25 = vector.load %arg5[%c0_12, %c0_13, %c0_14] : memref<1x32x256xf32, #tpu.memory_space<vmem>>, vector<1x32x256xf32>
    tpu.vector_store %arg5[%c0_12, %c0_13, %c0_14], %24 {strides = array<i32>} : memref<1x32x256xf32, #tpu.memory_space<vmem>>, vector<1x32x256xf32>,
    return
  }
  func.func @transform_0(%arg0: i32, %arg1: i32) -> (i32, i32, i32) {
    %c0_i32 = arith.constant 0 : i32
    %c0_i32_0 = arith.constant 0 : i32
    return %arg0, %c0_i32, %arg1 : i32, i32, i32
  }
  func.func @transform_1(%arg0: i32, %arg1: i32) -> (i32, i32, i32) {
    %c0_i32 = arith.constant 0 : i32
    %c0_i32_0 = arith.constant 0 : i32
    %c0_i32_1 = arith.constant 0 : i32
    %c0_i32_2 = arith.constant 0 : i32
    return %c0_i32, %c0_i32_0, %c0_i32_1 : i32, i32, i32
  }
  func.func @transform_2(%arg0: i32, %arg1: i32) -> (i32, i32, i32) {
    %c0_i32 = arith.constant 0 : i32
    %c0_i32_0 = arith.constant 0 : i32
    %c0_i32_1 = arith.constant 0 : i32
    %c0_i32_2 = arith.constant 0 : i32
    return %c0_i32, %c0_i32_0, %c0_i32_1 : i32, i32, i32
  }
  func.func @transform_3(%arg0: i32, %arg1: i32) -> (i32, i32, i32) {
    %c0_i32 = arith.constant 0 : i32
    %c0_i32_0 = arith.constant 0 : i32
    return %arg0, %c0_i32, %arg1 : i32, i32, i32
  }
}

</mosaic_0001>

<llo_original>
// kernel: tpu_custom_call.1
$region0: #{tpu_custom_call.1}
  #allocation0 [shape = 'u32[]', space=smem, size = 0x4, offset = 0x4, fixed_abs, tag = 'smem constant byte address 0x4 - core index']
  #allocation1 [shape = 'u32[144,128]{1,0:T(1,128)}', space=vmem, size = 0x12000, scoped, tag = 'internal scratch']
  %s0 = inlined_call_operand.hbm [shape: f32[2,32,256], index: 0, kind: input, shape index: {}]
  %s1 = inlined_call_operand.vmem [shape: f32[1,32,1], index: 1, kind: input, shape index: {}]
  %s2 = inlined_call_operand.vmem [shape: f32[1,32,1], index: 2, kind: input, shape index: {}]
  %s3 = inlined_call_operand.hbm [shape: f32[2,32,256], index: 3, kind: output, shape index: {}]
  %s4 = sld [smem:[#allocation0]]
  $region49: #{tpu_custom_call.1} parent=0
    _
  %s6 = ssub.s32 1, %s4
  %s7 = scalar_select 0, %s6, %s4
  $region1: #{tpu_custom_call.1} parent=0
    #allocation2 [shape = 'u8[65536]{0}', space=vmem, size = 0x10000, scoped, tag = 'input window, operand 0']
    #allocation3 [shape = 's32[2]{0}', space=sflag, size = 0x8, scoped, tag = 'scoped memory for tpu_custom_call.1']
    #allocation4 [shape = 's32[2]{0}', space=sflag, size = 0x8, scoped, tag = 'scoped memory for tpu_custom_call.1']
    #allocation5 [shape = 'u8[65536]{0}', space=vmem, size = 0x10000, scoped, tag = 'output window, operand 0']
    %8 = vsyncpa [#allocation3], 0
    %s9 = scalar_lea.sflag [#allocation3], 1
    %10 = vsyncpa %s9, 0
    %11 = vsyncpa [#allocation4], 0
    %s12 = scalar_lea.sflag [#allocation4], 1
    %13 = vsyncpa %s12, 0
    loop: start=0, step=1, limit=4
    $region2: #{tpu_custom_call.1} parent=1 // loop_pre_header
      _
    $region3: #{tpu_custom_call.1} parent=1 // loop_header
      %s15 = sphi 0, %s19
      %p16 = scmp.ge.s32.totalorder %s15, 4
      %s22 = sphi 0, %s34
      %s23 = sphi 0, %s30
      %s24 = sphi 0, %s22
      %s25 = sphi 0, %s23
      %s26 = sphi 0, %s24
      %s27 = sphi 0, %s25
      %s39 = sphi 0, %s41
      %s42 = sphi 0, %s39
      %s43 = sphi 0, %s42
      %s59 = sphi 0, %s43
      %s63 = sphi 0, %s63
      %s65 = sphi 0, %s63
      %s66 = sphi 0, %s65
      %s80 = sphi 0, %s66
      %s84 = sphi 0, %s84
      %s86 = sphi 0, %s84
      %s87 = sphi 0, %s86
      %s101 = sphi 0, %s87
      %s109 = sphi 0, %s111
      %s112 = sphi 0, %s109
      %s113 = sphi 0, %s112
      %s129 = sphi 0, %s113
    $region4: #{tpu_custom_call.1} parent=1 // loop_header_branch
      %18 = sbr.rel (%p16) target = $region8
    $region5: #{tpu_custom_call.1} parent=1 // loop_body
      %s20 = ssub.s32 %s15, 1
      %s21 = ssub.s32 %s15, 2
      %s28 = sadd.s32 1, %s23
      %p29 = scmp.ge.s32.totalorder %s28, 1
      %s30 = scalar_select %p29, 0, %s28
      %s31 = sadd.s32 1, %s22
      %s32 = scalar_select %p29, %s31, %s22
      %p33 = scmp.ge.s32.totalorder %s32, 2
      %s34 = scalar_select %p33, 0, %s32
      %s35 = ssub.s32 %s22, %s34
      %s36 = ssub.s32 %s23, %s30
      %s37 = sor.u32 %s35, %s36
      %p38 = scmp.eq.s32.totalorder %s37, 0
      %s40 = sadd.s32 %s39, 1
      %s41 = scalar_select %p38, %s39, %s40
      %p44 = pneg %p38
      %p45 = scmp.eq.s32.totalorder %s15, 1
      %p46 = por %p44, %p45
      %p47 = scmp.ne.s32.totalorder %s39, %s42
      %p48 = scmp.eq.s32.totalorder %s15, 0
      %p49 = por %p47, %p48
      %p50 = scmp.ne.s32.totalorder %s39, %s42
      %p51 = scmp.eq.s32.totalorder %s20, 1
      %p52 = por %p50, %p51
      %p53 = scmp.ne.s32.totalorder %s42, %s43
      %p54 = scmp.eq.s32.totalorder %s20, 0
      %p55 = por %p53, %p54
      %p56 = scmp.ne.s32.totalorder %s42, %s43
      %p57 = scmp.eq.s32.totalorder %s21, 1
      %p58 = por %p56, %p57
      %p60 = scmp.ne.s32.totalorder %s43, %s59
      %p61 = scmp.eq.s32.totalorder %s21, 0
      %p62 = por %p60, %p61
      %s64 = sadd.s32 %s63, 1
      %p67 = scmp.eq.s32.totalorder %s15, 1
      %p68 = scmp.ne.s32.totalorder %s63, %s65
      %p69 = scmp.eq.s32.totalorder %s15, 0
      %p70 = por %p68, %p69
      %p71 = scmp.ne.s32.totalorder %s63, %s65
      %p72 = scmp.eq.s32.totalorder %s20, 1
      %p73 = por %p71, %p72
      %p74 = scmp.ne.s32.totalorder %s65, %s66
      %p75 = scmp.eq.s32.totalorder %s20, 0
      %p76 = por %p74, %p75
      %p77 = scmp.ne.s32.totalorder %s65, %s66
      %p78 = scmp.eq.s32.totalorder %s21, 1
      %p79 = por %p77, %p78
      %p81 = scmp.ne.s32.totalorder %s66, %s80
      %p82 = scmp.eq.s32.totalorder %s21, 0
      %p83 = por %p81, %p82
      %s85 = sadd.s32 %s84, 1
      %p88 = scmp.eq.s32.totalorder %s15, 1
      %p89 = scmp.ne.s32.totalorder %s84, %s86
      %p90 = scmp.eq.s32.totalorder %s15, 0
      %p91 = por %p89, %p90
      %p92 = scmp.ne.s32.totalorder %s84, %s86
      %p93 = scmp.eq.s32.totalorder %s20, 1
      %p94 = por %p92, %p93
      %p95 = scmp.ne.s32.totalorder %s86, %s87
      %p96 = scmp.eq.s32.totalorder %s20, 0
      %p97 = por %p95, %p96
      %p98 = scmp.ne.s32.totalorder %s86, %s87
      %p99 = scmp.eq.s32.totalorder %s21, 1
      %p100 = por %p98, %p99
      %p102 = scmp.ne.s32.totalorder %s87, %s101
      %p103 = scmp.eq.s32.totalorder %s21, 0
      %p104 = por %p102, %p103
      %s105 = ssub.s32 %s22, %s34
      %s106 = ssub.s32 %s23, %s30
      %s107 = sor.u32 %s105, %s106
      %p108 = scmp.eq.s32.totalorder %s107, 0
      %s110 = sadd.s32 %s109, 1
      %s111 = scalar_select %p108, %s109, %s110
      %p114 = pneg %p108
      %p115 = scmp.eq.s32.totalorder %s15, 1
      %p116 = por %p114, %p115
      %p117 = scmp.ne.s32.totalorder %s109, %s112
      %p118 = scmp.eq.s32.totalorder %s15, 0
      %p119 = por %p117, %p118
      %p120 = scmp.ne.s32.totalorder %s109, %s112
      %p121 = scmp.eq.s32.totalorder %s20, 1
      %p122 = por %p120, %p121
      %p123 = scmp.ne.s32.totalorder %s112, %s113
      %p124 = scmp.eq.s32.totalorder %s20, 0
      %p125 = por %p123, %p124
      %p126 = scmp.ne.s32.totalorder %s112, %s113
      %p127 = scmp.eq.s32.totalorder %s21, 1
      %p128 = por %p126, %p127
      %p130 = scmp.ne.s32.totalorder %s113, %s129
      %p131 = scmp.eq.s32.totalorder %s21, 0
      %p132 = por %p130, %p131
      %p133 = scmp.le.s32.totalorder 1, %s15
      %p134 = scmp.lt.s32.totalorder %s15, 3
      %p135 = pnand %p133, %p134
      %p136 = pneg %p135
      // Predicated region
      $region9: #{tpu_custom_call.1} parent=5 // pred_check
        _
      $region10: #{tpu_custom_call.1} parent=5 // pred_check_branch
        %138 = sbr.rel (%p135) target = $region12
      $region11: #{tpu_custom_call.1} parent=5 // pred_region
        %s139 = ssub.s32 %s15, 1
        // Predicated region
        $region13: #{tpu_custom_call.1} parent=11 // pred_check
          %p140 = pneg %p76
        $region14: #{tpu_custom_call.1} parent=11 // pred_check_branch
          %142 = sbr.rel (%p140) target = $region16
        $region15: #{tpu_custom_call.1} parent=11 // pred_region
          _
        $region16: #{tpu_custom_call.1} parent=11 // pred_fallthru
          _
        // Predicated region
        $region17: #{tpu_custom_call.1} parent=11 // pred_check
          %p143 = pneg %p97
        $region18: #{tpu_custom_call.1} parent=11 // pred_check_branch
          %145 = sbr.rel (%p143) target = $region20
        $region19: #{tpu_custom_call.1} parent=11 // pred_region
          _
        $region20: #{tpu_custom_call.1} parent=11 // pred_fallthru
          _
      $region12: #{tpu_custom_call.1} parent=5 // pred_fallthru
        _
      %p146 = scmp.lt.s32.totalorder %s15, 2
      // Predicated region
      $region21: #{tpu_custom_call.1} parent=5 // pred_check
        %p147 = pneg %p146
      $region22: #{tpu_custom_call.1} parent=5 // pred_check_branch
        %149 = sbr.rel (%p147) target = $region24
      $region23: #{tpu_custom_call.1} parent=5 // pred_region
        // Predicated region
        $region25: #{tpu_custom_call.1} parent=23 // pred_check
          %p150 = pneg %p49
        $region26: #{tpu_custom_call.1} parent=23 // pred_check_branch
          %152 = sbr.rel (%p150) target = $region28
        $region27: #{tpu_custom_call.1} parent=23 // pred_region
          %s153 = sand.u32 %s39, 1
          %s154 = scalar_lea.sflag [#allocation3], %s153
          %s155 = sand.u32 %s39, 1
          %s156 = smul.addr %s155, 64
          %s157 = scalar_lea.vmem [#allocation2], %s156
          %s158 = smul.u32 2, %s23
          %s160 = ssub.s32 1024, 1024
          %161 = vsyncadd %s154, %s160
          %s162 = smul.addr %s22, 8
          %s163 = sadd.s32 %s158, %s162
          %s164 = smul.addr %s163, 128
          %s165 = scalar_lea.hbm %s0, %s164
          %s166 = sshll.u32 %s157, 4
          %s167 = int_to_ptr.vmem [resolvable:$true] %s166
          %172 = dma.hbm_to_vmem [thread:$0]  %s165, 1024, %s167, %s154, 256, 256, 16
        $region28: #{tpu_custom_call.1} parent=23 // pred_fallthru
          _
      $region24: #{tpu_custom_call.1} parent=5 // pred_fallthru
        _
      %p173 = scmp.le.s32.totalorder 1, %s15
      %p174 = scmp.lt.s32.totalorder %s15, 3
      %p175 = pnand %p173, %p174
      %p176 = pneg %p175
      // Predicated region
      $region29: #{tpu_custom_call.1} parent=5 // pred_check
        _
      $region30: #{tpu_custom_call.1} parent=5 // pred_check_branch
        %178 = sbr.rel (%p175) target = $region32
      $region31: #{tpu_custom_call.1} parent=5 // pred_region
        %s179 = ssub.s32 %s15, 1
        %s180 = sand.u32 %s42, 1
        %s181 = scalar_lea.sflag [#allocation3], %s180
        %s182 = sand.u32 %s42, 1
        %s183 = smul.addr %s182, 64
        %s184 = scalar_lea.vmem [#allocation2], %s183
        // Predicated region
        $region33: #{tpu_custom_call.1} parent=31 // pred_check
          %p185 = pneg %p55
        $region34: #{tpu_custom_call.1} parent=31 // pred_check_branch
          %187 = sbr.rel (%p185) target = $region36
        $region35: #{tpu_custom_call.1} parent=31 // pred_region
          %188 = dma.done %s181, 1024
        $region36: #{tpu_custom_call.1} parent=31 // pred_fallthru
          _
        %s189 = sand.u32 %s42, 1
        %s190 = scalar_lea.sflag [#allocation3], %s189
        %s191 = sand.u32 %s42, 1
        %s192 = smul.addr %s191, 64
        %s193 = scalar_lea.vmem [#allocation2], %s192
        %p194 = pneg %p55
        %p195 = pneg %p52
        %p196 = pneg %p76
        %p197 = pneg %p73
        %p198 = pneg %p97
        %p199 = pneg %p94
        %p200 = pneg %p125
        %p201 = pneg %p122
        %s202 = sand.u32 %s112, 1
        %s203 = scalar_lea.sflag [#allocation4], %s202
        %s204 = sand.u32 %s112, 1
        %s205 = smul.addr %s204, 64
        %s206 = scalar_lea.vmem [#allocation5], %s205
        %s207 = smul.u32 2, %s25
        %s208 = smul.u32 2, %s25
        %v209 = vld [vmem:[%s184] sm:$0xff]
        %v210 = vld [vmem:[%s184 + $0x8] sm:$0xff]
        %v211 = vld [vmem:[%s184 + $0x10] sm:$0xff]
        %v212 = vld [vmem:[%s184 + $0x18] sm:$0xff]
        %v213 = vld [vmem:[%s184 + $0x20] sm:$0xff]
        %v214 = vld [vmem:[%s184 + $0x28] sm:$0xff]
        %v215 = vld [vmem:[%s184 + $0x30] sm:$0xff]
        %v216 = vld [vmem:[%s184 + $0x38] sm:$0xff]
        %v217 = vld [vmem:[%s1] sm:$0xff]
        %v218 = vld [vmem:[%s1 + $0x8] sm:$0xff]
        %v219 = vld [vmem:[%s1 + $0x10] sm:$0xff]
        %v220 = vld [vmem:[%s1 + $0x18] sm:$0xff]
        %v221 = vld [vmem:[%s2] sm:$0xff]
        %v222 = vld [vmem:[%s2 + $0x8] sm:$0xff]
        %v223 = vld [vmem:[%s2 + $0x10] sm:$0xff]
        %v224 = vld [vmem:[%s2 + $0x18] sm:$0xff]
        %v225 = vadd.f32 %v209, %v211
        %v226 = vadd.f32 %v225, %v213
        %v227 = vadd.f32 %v226, %v215
        %v228 = vrot.slane %v227, 4
        %v229 = vadd.f32 %v227, %v228
        %v230 = vrot.slane %v229, 2
        %v231 = vadd.f32 %v229, %v230
        %v232 = vrot.slane %v231, 1
        %v233 = vadd.f32 %v231, %v232
        %v234 = vadd.f32 %v210, %v212
        %v235 = vadd.f32 %v234, %v214
        %v236 = vadd.f32 %v235, %v216
        %v237 = vrot.slane %v236, 4
        %v238 = vadd.f32 %v236, %v237
        %v239 = vrot.slane %v238, 2
        %v240 = vadd.f32 %v238, %v239
        %v241 = vrot.slane %v240, 1
        %v242 = vadd.f32 %v240, %v241
        %v243 = vrcp.pop 32.0
        %v244 = vmul.f32 %v233, %v243
        %v245 = vmul.f32 %v242, %v243
        %v246 = vmul.f32 %v209, %v209
        %v247 = vmul.f32 %v210, %v210
        %v248 = vmul.f32 %v211, %v211
        %v249 = vmul.f32 %v212, %v212
        %v250 = vmul.f32 %v213, %v213
        %v251 = vmul.f32 %v214, %v214
        %v252 = vmul.f32 %v215, %v215
        %v253 = vmul.f32 %v216, %v216
        %v254 = vadd.f32 %v246, %v248
        %v255 = vadd.f32 %v254, %v250
        %v256 = vadd.f32 %v255, %v252
        %v257 = vrot.slane %v256, 4
        %v258 = vadd.f32 %v256, %v257
        %v259 = vrot.slane %v258, 2
        %v260 = vadd.f32 %v258, %v259
        %v261 = vrot.slane %v260, 1
        %v262 = vadd.f32 %v260, %v261
        %v263 = vadd.f32 %v247, %v249
        %v264 = vadd.f32 %v263, %v251
        %v265 = vadd.f32 %v264, %v253
        %v266 = vrot.slane %v265, 4
        %v267 = vadd.f32 %v265, %v266
        %v268 = vrot.slane %v267, 2
        %v269 = vadd.f32 %v267, %v268
        %v270 = vrot.slane %v269, 1
        %v271 = vadd.f32 %v269, %v270
        %v272 = vmul.f32 %v262, %v243
        %v273 = vmul.f32 %v271, %v243
        %v274 = vmul.f32 %v244, %v244
        %v275 = vmul.f32 %v245, %v245
        %v276 = vsub.f32 %v272, %v274
        %v277 = vsub.f32 %v273, %v275
        %v278 = vadd.f32 %v276, 1e-05
        %v279 = vadd.f32 %v277, 1e-05
        %v280 = vrsqrt.pop %v278
        %v281 = vrsqrt.pop %v279
        %v282 = vsub.f32 %v209, %v244
        %v283 = vsub.f32 %v210, %v245
        %v284 = vsub.f32 %v211, %v244
        %v285 = vsub.f32 %v212, %v245
        %v286 = vsub.f32 %v213, %v244
        %v287 = vsub.f32 %v214, %v245
        %v288 = vsub.f32 %v215, %v244
        %v289 = vsub.f32 %v216, %v245
        %v290 = vmul.f32 %v282, %v280
        %v291 = vmul.f32 %v283, %v281
        %v292 = vmul.f32 %v284, %v280
        %v293 = vmul.f32 %v285, %v281
        %v294 = vmul.f32 %v286, %v280
        %v295 = vmul.f32 %v287, %v281
        %v296 = vmul.f32 %v288, %v280
        %v297 = vmul.f32 %v289, %v281
        %299 = vset.pattern.permute.xlu0 0
        %300 = vperm.xlu0 %299, %v217
        %v301 = vpop.permute.xlu0 %300
        %304 = vset.pattern.permute.xlu0 0
        %305 = vperm.xlu0 %304, %v218
        %v306 = vpop.permute.xlu0 %305
        %309 = vset.pattern.permute.xlu0 0
        %310 = vperm.xlu0 %309, %v219
        %v311 = vpop.permute.xlu0 %310
        %314 = vset.pattern.permute.xlu0 0
        %315 = vperm.xlu0 %314, %v220
        %v316 = vpop.permute.xlu0 %315
        %v318 = vmul.f32 %v290, %v301
        %v319 = vmul.f32 %v291, %v301
        %v320 = vmul.f32 %v292, %v306
        %v321 = vmul.f32 %v293, %v306
        %v322 = vmul.f32 %v294, %v311
        %v323 = vmul.f32 %v295, %v311
        %v324 = vmul.f32 %v296, %v316
        %v325 = vmul.f32 %v297, %v316
        %327 = vset.pattern.permute.xlu0 0
        %328 = vperm.xlu0 %327, %v221
        %v329 = vpop.permute.xlu0 %328
        %332 = vset.pattern.permute.xlu0 0
        %333 = vperm.xlu0 %332, %v222
        %v334 = vpop.permute.xlu0 %333
        %337 = vset.pattern.permute.xlu0 0
        %338 = vperm.xlu0 %337, %v223
        %v339 = vpop.permute.xlu0 %338
        %342 = vset.pattern.permute.xlu0 0
        %343 = vperm.xlu0 %342, %v224
        %v344 = vpop.permute.xlu0 %343
        %v346 = vadd.f32 %v318, %v329
        %v347 = vadd.f32 %v319, %v329
        %v348 = vadd.f32 %v320, %v334
        %v349 = vadd.f32 %v321, %v334
        %v350 = vadd.f32 %v322, %v339
        %v351 = vadd.f32 %v323, %v339
        %v352 = vadd.f32 %v324, %v344
        %v353 = vadd.f32 %v325, %v344
        %354 = vst [vmem:[%s206] sm:$0xff] %v346
        %355 = vst [vmem:[%s206 + $0x8] sm:$0xff] %v347
        %356 = vst [vmem:[%s206 + $0x10] sm:$0xff] %v348
        %357 = vst [vmem:[%s206 + $0x18] sm:$0xff] %v349
        %358 = vst [vmem:[%s206 + $0x20] sm:$0xff] %v350
        %359 = vst [vmem:[%s206 + $0x28] sm:$0xff] %v351
        %360 = vst [vmem:[%s206 + $0x30] sm:$0xff] %v352
        %361 = vst [vmem:[%s206 + $0x38] sm:$0xff] %v353
        %s362 = sand.u32 %s112, 1
        %s363 = scalar_lea.sflag [#allocation4], %s362
        %s364 = sand.u32 %s112, 1
        %s365 = smul.addr %s364, 64
        %s366 = scalar_lea.vmem [#allocation5], %s365
        // Predicated region
        $region37: #{tpu_custom_call.1} parent=31 // pred_check
          %p367 = pneg %p122
        $region38: #{tpu_custom_call.1} parent=31 // pred_check_branch
          %369 = sbr.rel (%p367) target = $region40
        $region39: #{tpu_custom_call.1} parent=31 // pred_region
          %s370 = smul.u32 2, %s25
          %s372 = ssub.s32 1024, 1024
          %373 = vsyncadd %s363, %s372
          %s374 = smul.addr %s24, 8
          %s375 = sadd.s32 %s370, %s374
          %s376 = smul.addr %s375, 128
          %s377 = scalar_lea.hbm %s3, %s376
          %s378 = sshll.u32 %s366, 4
          %s379 = int_to_ptr.vmem [resolvable:$true] %s378
          %384 = dma.vmem_to_hbm [thread:$0]  %s379, 1024, %s377, %s363, 256, 256, 16
        $region40: #{tpu_custom_call.1} parent=31 // pred_fallthru
          _
      $region32: #{tpu_custom_call.1} parent=5 // pred_fallthru
        _
      %p385 = scmp.le.s32.totalorder 2, %s15
      // Predicated region
      $region41: #{tpu_custom_call.1} parent=5 // pred_check
        %p386 = pneg %p385
      $region42: #{tpu_custom_call.1} parent=5 // pred_check_branch
        %388 = sbr.rel (%p386) target = $region44
      $region43: #{tpu_custom_call.1} parent=5 // pred_region
        %s389 = ssub.s32 %s15, 2
        // Predicated region
        $region45: #{tpu_custom_call.1} parent=43 // pred_check
          %p390 = pneg %p128
        $region46: #{tpu_custom_call.1} parent=43 // pred_check_branch
          %392 = sbr.rel (%p390) target = $region48
        $region47: #{tpu_custom_call.1} parent=43 // pred_region
          %s393 = sand.u32 %s113, 1
          %s394 = scalar_lea.sflag [#allocation4], %s393
          %s395 = sand.u32 %s113, 1
          %s396 = smul.addr %s395, 64
          %s397 = scalar_lea.vmem [#allocation5], %s396
          %398 = dma.done %s394, 1024
        $region48: #{tpu_custom_call.1} parent=43 // pred_fallthru
          _
      $region44: #{tpu_custom_call.1} parent=5 // pred_fallthru
        _
    $region6: #{tpu_custom_call.1} parent=1 // loop_footer
      %s19 = sadd.s32 1, %s15
    $region7: #{tpu_custom_call.1} parent=1 // loop_footer_branch
      %14 = sbr.rel target = $region3
    $region8: #{tpu_custom_call.1} parent=1 // loop_exit
      _
    %399 = vsyncpa [#allocation3], 1
    %s400 = scalar_lea.sflag [#allocation3], 1
    %401 = vsyncpa %s400, 1
    %402 = vsyncpa [#allocation4], 1
    %s403 = scalar_lea.sflag [#allocation4], 1
    %404 = vsyncpa %s403, 1

</llo_original>
